<compile_context>
chip_gen: v5e
topology: v5e:2x2
jax: 0.10.0
libtpu: 0.0.40
codegen_flags: <defaults>
</compile_context>

<pallas_src>
import jax
import jax.numpy as jnp
import numpy as np
from jax.experimental import pallas as pl
from jax.experimental.pallas import tpu as pltpu

LANE = 128
SUBLANE = 8


def _round_up(x, m):
    return (x + m - 1) // m * m


def _make_csi_kernel(P, B_slab, TR, Bsp):
    """Kernel closure over static shape constants."""
    inv_p = 1.0 / float(P)

    def kernel(p_ref, wc_ref, bc_ref, wh_ref, bh_ref, out_ref, feat_acc):
        # p_ref:    (TR, KD)    bf16 im2col patch rows for this slab/row tile
        # wc_ref:   (KD, Dp)    bf16 conv weight (resident)
        # bc_ref:   (1, Dp)     f32 conv bias
        # wh_ref:   (Dp, ZCp)   bf16 head weight (resident)
        # bh_ref:   (1, ZCp)    f32 head bias
        # out_ref:  (Bsp, ZCp)  f32 flat logits for this slab (written at last tile)
        # feat_acc: (Bsp, Dp)   f32 VMEM accumulator of pooled features
        r = pl.program_id(1)

        @pl.when(r == 0)
        def _():
            feat_acc[...] = jnp.zeros_like(feat_acc)

        # Conv as one im2col GEMM on the MXU (bf16 in, f32 acc); bias+ReLU on VPU.
        fmap = jnp.dot(p_ref[...], wc_ref[...], preferred_element_type=jnp.float32)
        fmap = jnp.maximum(fmap + bc_ref[...], 0.0)                    # (TR, Dp) f32

        # In-kernel pooling operand (replaces the old HBM pooling matrix):
        # pool[b, c] = 1/P iff global row (r*TR + c) belongs to batch item b of
        # this slab.  Range-compare form (no vector integer division); the
        # rows < B_slab / cols-in-range masks keep padded rows out of the mean.
        cols = jax.lax.broadcasted_iota(jnp.int32, (Bsp, TR), 1) + r * TR
        rows = jax.lax.broadcasted_iota(jnp.int32, (Bsp, TR), 0)
        lo = rows * P
        pool = jnp.where(
            (cols >= lo) & (cols < lo + P) & (rows < B_slab),
            jnp.float32(inv_p), jnp.float32(0.0))

        # Global-average-pool as a second MXU GEMM, accumulated across row tiles.
        feat_acc[...] += jnp.dot(pool, fmap, preferred_element_type=jnp.float32)

        # Head GEMM + bias once, at the final row tile of this slab.
        @pl.when(r == pl.num_programs(1) - 1)
        def _():
            out_ref[...] = (
                jnp.dot(feat_acc[...].astype(jnp.bfloat16), wh_ref[...],
                        preferred_element_type=jnp.float32)
                + bh_ref[...])

    return kernel


def im2col_3x3(x_nhwc):
    """x_nhwc: [B, H, W, Cin] -> patches [B, H*W, 9*Cin] (stride=1, pad=1)."""
    B, H, W, Cin = x_nhwc.shape
    xp = jnp.pad(x_nhwc, ((0, 0), (1, 1), (1, 1), (0, 0)))
    taps = []
    for kh in range(3):
        for kw in range(3):
            taps.append(xp[:, kh:kh + H, kw:kw + W, :])          # [B, H, W, Cin]
    patches = jnp.stack(taps, axis=3)                            # [B, H, W, 9, Cin]
    return patches.reshape(B, H * W, 9 * Cin)


def csi_model_forward(x_nchw, params, n_zones, n_classes_per_zone, *,
                      row_tile=1024, n_slabs=2):
    """Full CSIModel forward: [B, C, H, W] -> [B, n_zones, n_classes_per_zone]."""
    B, Cin, H, W = x_nchw.shape
    wc, bc, wh, bh = params
    KD, D = wc.shape
    ZC = wh.shape[1]
    assert ZC == n_zones * n_classes_per_zone
    P = H * W

    # ---- slab partitioning of the batch (outer "parallel" grid axis) ----
    n_slabs = max(1, min(n_slabs, B))
    B_slab = -(-B // n_slabs)                      # batch items per slab (ceil)
    n_slabs = -(-B // B_slab)                      # drop empty slabs
    bp_slab = B_slab * P                           # patch rows per slab

    Dp = _round_up(D, LANE)
    ZCp = _round_up(ZC, LANE)
    Bsp = _round_up(B_slab, SUBLANE)

    # Row tile: biggest that covers a slab, rounded to a bf16-friendly sublane
    # multiple so arbitrary row_tile values never produce an illegal BlockSpec.
    TR = _round_up(min(row_tile, bp_slab), 16)
    bp_slab_p = _round_up(bp_slab, TR)
    n_row_tiles = bp_slab_p // TR
    assert TR % SUBLANE == 0 and bp_slab_p % TR == 0

    # ---- host/XLA glue: layout + im2col + bf16 casts (done once) ----
    x_nhwc = jnp.transpose(x_nchw, (0, 2, 3, 1))
    patches = im2col_3x3(x_nhwc)                                 # (B, P, KD) f32
    patches = jnp.pad(patches, ((0, n_slabs * B_slab - B), (0, 0), (0, 0)))
    patches = patches.reshape(n_slabs, bp_slab, KD)
    patches = jnp.pad(patches, ((0, 0), (0, bp_slab_p - bp_slab), (0, 0)))
    patches = patches.astype(jnp.bfloat16)        # dominant HBM stream: bf16, K unpadded

    wc_p = jnp.zeros((KD, Dp), jnp.bfloat16).at[:, :D].set(wc.astype(jnp.bfloat16))
    bc_p = jnp.zeros((1, Dp), jnp.float32).at[:, :D].set(bc.reshape(1, D))
    wh_p = jnp.zeros((Dp, ZCp), jnp.bfloat16).at[:D, :ZC].set(wh.astype(jnp.bfloat16))
    bh_p = jnp.zeros((1, ZCp), jnp.float32).at[:, :ZC].set(bh.reshape(1, ZC))

    kernel = _make_csi_kernel(P, B_slab, TR, Bsp)

    flops = (n_slabs * n_row_tiles * (2 * TR * KD * Dp + 2 * Bsp * TR * Dp)
             + n_slabs * 2 * Bsp * Dp * ZCp)
    bytes_accessed = (2 * patches.size + 2 * wc_p.size + 2 * wh_p.size
                      + 4 * bc_p.size + 4 * bh_p.size + 4 * n_slabs * Bsp * ZCp)

    # Actual VMEM footprint at TR=1024 is ~1-2 MiB (2x double-buffered bf16 patch
    # tiles + resident weights + f32 fmap temp + (Bsp,Dp) accumulator), far below
    # the default scoped VMEM limit on v5e/v6e/v7x, so no vmem_limit override.
    out_p = pl.pallas_call(
        kernel,
        out_shape=jax.ShapeDtypeStruct((n_slabs, Bsp, ZCp), jnp.float32),
        grid_spec=pltpu.PrefetchScalarGridSpec(
            num_scalar_prefetch=0,
            grid=(n_slabs, n_row_tiles),
            in_specs=[
                pl.BlockSpec((None, TR, KD), lambda s, r: (s, r, 0)),  # patch rows
                pl.BlockSpec((KD, Dp), lambda s, r: (0, 0)),           # conv weight
                pl.BlockSpec((1, Dp), lambda s, r: (0, 0)),            # conv bias
                pl.BlockSpec((Dp, ZCp), lambda s, r: (0, 0)),          # head weight
                pl.BlockSpec((1, ZCp), lambda s, r: (0, 0)),           # head bias
            ],
            out_specs=pl.BlockSpec((None, Bsp, ZCp), lambda s, r: (s, 0, 0)),
            scratch_shapes=[pltpu.VMEM((Bsp, Dp), jnp.float32)],
        ),
        compiler_params=pltpu.CompilerParams(
            dimension_semantics=("parallel", "arbitrary"),
        ),
        cost_estimate=pl.CostEstimate(
            flops=flops, transcendentals=0, bytes_accessed=bytes_accessed),
    )(patches, wc_p, bc_p, wh_p, bh_p)

    out = out_p[:, :B_slab, :ZC].reshape(n_slabs * B_slab, ZC)[:B]
    return out.reshape(B, n_zones, n_classes_per_zone)


def reference_forward(x_nchw, params, n_zones, n_classes_per_zone):
    """Pure-JAX f32 reference of the same math, for a correctness check."""
    x_nhwc = jnp.transpose(x_nchw, (0, 2, 3, 1))
    patches = im2col_3x3(x_nhwc)
    wc, bc, wh, bh = params
    fmap = jnp.maximum(jnp.einsum("bpk,kd->bpd", patches, wc) + bc.reshape(1, 1, -1), 0.0)
    feat = jnp.mean(fmap, axis=1)                                # [B, D]
    logits = feat @ wh + bh.reshape(1, -1)                       # [B, ZC]
    return logits.reshape(x_nchw.shape[0], n_zones, n_classes_per_zone)


if __name__ == "__main__":
    # Small shapes consistent with the module's forward contract.
    B, Cin, H, W = 2, 4, 16, 16          # input images [B, C, H, W]
    D = 32                               # backbone feature dim
    N_ZONES = 6                          # standard CSI chest-zone count
    N_CLASSES = 5                        # n_classes_per_zone (default)
    ZC = N_ZONES * N_CLASSES
    KD = 9 * Cin                         # 3x3 conv, im2col feature dim

    key = jax.random.PRNGKey(0)
    kx, kwc, kbc, kwh, kbh = jax.random.split(key, 5)

    x = jax.random.normal(kx, (B, Cin, H, W), dtype=jnp.float32)

    # Deterministic synthetic parameters (no checkpoint load).
    # Conv weight in im2col layout [KH*KW*Cin, D]; equivalent to a PyTorch
    # Conv2d weight [D, Cin, 3, 3] transposed to [KH, KW, Cin, D] and flattened.
    wc = jax.random.normal(kwc, (KD, D), dtype=jnp.float32) * 0.1
    bc = jax.random.normal(kbc, (D,), dtype=jnp.float32) * 0.1
    wh = jax.random.normal(kwh, (D, ZC), dtype=jnp.float32) * 0.1
    bh = jax.random.normal(kbh, (ZC,), dtype=jnp.float32) * 0.1
    params = (wc, bc, wh, bh)

    out = csi_model_forward(x, params, N_ZONES, N_CLASSES)
    out = jax.block_until_ready(out)
    assert out.shape == (B, N_ZONES, N_CLASSES), out.shape

    ref = jax.block_until_ready(reference_forward(x, params, N_ZONES, N_CLASSES))
    # bf16 operands + f32 accumulation -> slightly looser tolerance than pure f32.
    np.testing.assert_allclose(np.asarray(out), np.asarray(ref), rtol=2e-2, atol=2e-2)

    print("KERNEL_OK")
</pallas_src>

<mosaic_0001>
module attributes {stable_mosaic.version = 11 : i64} {
  func.func @kernel(%arg0: i32, %arg1: i32, %arg2: memref<1x256x36xbf16, #tpu.memory_space<vmem>>, %arg3: memref<36x128xbf16, #tpu.memory_space<vmem>>, %arg4: memref<1x128xf32, #tpu.memory_space<vmem>>, %arg5: memref<128x128xbf16, #tpu.memory_space<vmem>>, %arg6: memref<1x128xf32, #tpu.memory_space<vmem>>, %arg7: memref<1x8x128xf32, #tpu.memory_space<vmem>>, %arg8: memref<8x128xf32, #tpu.memory_space<vmem>>) attributes {dimension_semantics = [#tpu.dimension_semantics<parallel>, #tpu.dimension_semantics<arbitrary>], iteration_bounds = array<i64: 2, 1>, scalar_prefetch = 0 : i64, scratch_operands = 1 : i64, tpu.core_type = #tpu.core_type<tc>, window_params = [{transform_indices = @transform_0, window_bounds = array<i64: 1, 256, 36>}, {pipeline_mode = #tpu.pipeline_mode<synchronous>, transform_indices = @transform_1, window_bounds = array<i64: 36, 128>}, {pipeline_mode = #tpu.pipeline_mode<synchronous>, transform_indices = @transform_2, window_bounds = array<i64: 1, 128>}, {pipeline_mode = #tpu.pipeline_mode<synchronous>, transform_indices = @transform_3, window_bounds = array<i64: 128, 128>}, {pipeline_mode = #tpu.pipeline_mode<synchronous>, transform_indices = @transform_4, window_bounds = array<i64: 1, 128>}, {transform_indices = @transform_5, window_bounds = array<i64: 1, 8, 128>}]} {
    %c0_i32 = arith.constant 0 : i32
    %0 = arith.cmpi eq, %arg1, %c0_i32 : i32
    %1 = arith.extui %0 : i1 to i32
    %c0_i32_0 = arith.constant 0 : i32
    %2 = arith.cmpi ne, %1, %c0_i32_0 : i32
    scf.if %2 {
      %cst_19 = arith.constant 0.000000e+00 : f32
      %37 = vector.broadcast %cst_19 : f32 to vector<8x128xf32>
      %c0_20 = arith.constant 0 : index
      %c0_21 = arith.constant 0 : index
      %38 = vector.load %arg8[%c0_20, %c0_21] : memref<8x128xf32, #tpu.memory_space<vmem>>, vector<8x128xf32>
      tpu.vector_store %arg8[%c0_20, %c0_21], %37 {strides = array<i32>} : memref<8x128xf32, #tpu.memory_space<vmem>>, vector<8x128xf32>,
    } else {
    }
    %c0 = arith.constant 0 : index
    %c0_1 = arith.constant 0 : index
    %c0_2 = arith.constant 0 : index
    %3 = vector.load %arg2[%c0, %c0_1, %c0_2] : memref<1x256x36xbf16, #tpu.memory_space<vmem>>, vector<1x256x36xbf16>
    %4 = vector.shape_cast %3 : vector<1x256x36xbf16> to vector<256x36xbf16>
    %c0_3 = arith.constant 0 : index
    %c0_4 = arith.constant 0 : index
    %5 = vector.load %arg3[%c0_3, %c0_4] : memref<36x128xbf16, #tpu.memory_space<vmem>>, vector<36x128xbf16>
    %cst = arith.constant dense<0.000000e+00> : vector<256x128xf32>
    %6 = tpu.matmul %4, %5, %cst {dimension_numbers = #tpu.dot_dimension_numbers<[1], [0], [0], [1], [0, 0, 1, 1], [], []>} : vector<256x36xbf16>, vector<36x128xbf16>, vector<256x128xf32> -> vector<256x128xf32>
    %c0_5 = arith.constant 0 : index
    %c0_6 = arith.constant 0 : index
    %7 = vector.load %arg4[%c0_5, %c0_6] : memref<1x128xf32, #tpu.memory_space<vmem>>, vector<1x128xf32>
    %8 = vector.broadcast %7 : vector<1x128xf32> to vector<256x128xf32>
    %9 = arith.addf %6, %8 : vector<256x128xf32>
    %cst_7 = arith.constant 0.000000e+00 : f32
    %10 = vector.broadcast %cst_7 : f32 to vector<256x128xf32>
    %11 = arith.maximumf %9, %10 : vector<256x128xf32>
    %12 = tpu.iota {dimensions = array<i32: 1>} : vector<8x256xi32>
    %c256_i32 = arith.constant 256 : i32
    %13 = arith.muli %arg1, %c256_i32 : i32
    %14 = vector.broadcast %13 : i32 to vector<8x256xi32>
    %15 = arith.addi %12, %14 : vector<8x256xi32>
    %16 = tpu.iota {dimensions = array<i32: 0>} : vector<8x256xi32>
    %c256_i32_8 = arith.constant 256 : i32
    %17 = vector.broadcast %c256_i32_8 : i32 to vector<8x256xi32>
    %18 = arith.muli %16, %17 : vector<8x256xi32>
    %19 = arith.cmpi sge, %15, %18 : vector<8x256xi32>
    %c256_i32_9 = arith.constant 256 : i32
    %20 = vector.broadcast %c256_i32_9 : i32 to vector<8x256xi32>
    %21 = arith.addi %18, %20 : vector<8x256xi32>
    %22 = arith.cmpi slt, %15, %21 : vector<8x256xi32>
    %23 = arith.andi %19, %22 : vector<8x256xi1>
    %c1_i32 = arith.constant 1 : i32
    %24 = vector.broadcast %c1_i32 : i32 to vector<8x256xi32>
    %25 = arith.cmpi slt, %16, %24 : vector<8x256xi32>
    %26 = arith.andi %23, %25 : vector<8x256xi1>
    %cst_10 = arith.constant 3.906250e-03 : f32
    %cst_11 = arith.constant 0.000000e+00 : f32
    %27 = vector.broadcast %cst_10 : f32 to vector<8x256xf32>
    %28 = vector.broadcast %cst_11 : f32 to vector<8x256xf32>
    %29 = arith.select %26, %27, %28 : vector<8x256xi1>, vector<8x256xf32>
    %c0_12 = arith.constant 0 : index
    %c0_13 = arith.constant 0 : index
    %30 = vector.load %arg8[%c0_12, %c0_13] : memref<8x128xf32, #tpu.memory_space<vmem>>, vector<8x128xf32>
    %cst_14 = arith.constant dense<0.000000e+00> : vector<8x128xf32>
    %31 = tpu.matmul %29, %11, %cst_14 {dimension_numbers = #tpu.dot_dimension_numbers<[1], [0], [0], [1], [0, 0, 1, 1], [], []>} : vector<8x256xf32>, vector<256x128xf32>, vector<8x128xf32> -> vector<8x128xf32>
    %32 = arith.addf %30, %31 : vector<8x128xf32>
    %c0_15 = arith.constant 0 : index
    %c0_16 = arith.constant 0 : index
    %33 = vector.load %arg8[%c0_15, %c0_16] : memref<8x128xf32, #tpu.memory_space<vmem>>, vector<8x128xf32>
    tpu.vector_store %arg8[%c0_15, %c0_16], %32 {strides = array<i32>} : memref<8x128xf32, #tpu.memory_space<vmem>>, vector<8x128xf32>,
    %c0_i32_17 = arith.constant 0 : i32
    %34 = arith.cmpi eq, %arg1, %c0_i32_17 : i32
    %35 = arith.extui %34 : i1 to i32
    %c0_i32_18 = arith.constant 0 : i32
    %36 = arith.cmpi ne, %35, %c0_i32_18 : i32
    scf.if %36 {
      %c0_19 = arith.constant 0 : index
      %c0_20 = arith.constant 0 : index
      %37 = vector.load %arg8[%c0_19, %c0_20] : memref<8x128xf32, #tpu.memory_space<vmem>>, vector<8x128xf32>
      %38 = arith.truncf %37 : vector<8x128xf32> to vector<8x128xbf16>
      %c0_21 = arith.constant 0 : index
      %c0_22 = arith.constant 0 : index
      %39 = vector.load %arg5[%c0_21, %c0_22] : memref<128x128xbf16, #tpu.memory_space<vmem>>, vector<128x128xbf16>
      %cst_23 = arith.constant dense<0.000000e+00> : vector<8x128xf32>
      %40 = tpu.matmul %38, %39, %cst_23 {dimension_numbers = #tpu.dot_dimension_numbers<[1], [0], [0], [1], [0, 0, 1, 1], [], []>} : vector<8x128xbf16>, vector<128x128xbf16>, vector<8x128xf32> -> vector<8x128xf32>
      %c0_24 = arith.constant 0 : index
      %c0_25 = arith.constant 0 : index
      %41 = vector.load %arg6[%c0_24, %c0_25] : memref<1x128xf32, #tpu.memory_space<vmem>>, vector<1x128xf32>
      %42 = vector.broadcast %41 : vector<1x128xf32> to vector<8x128xf32>
      %43 = arith.addf %40, %42 : vector<8x128xf32>
      %c0_26 = arith.constant 0 : index
      %c0_27 = arith.constant 0 : index
      %c0_28 = arith.constant 0 : index
      %44 = vector.load %arg7[%c0_26, %c0_27, %c0_28] : memref<1x8x128xf32, #tpu.memory_space<vmem>>, vector<1x8x128xf32>
      %45 = vector.shape_cast %44 : vector<1x8x128xf32> to vector<8x128xf32>
      %46 = vector.shape_cast %43 : vector<8x128xf32> to vector<1x8x128xf32>
      tpu.vector_store %arg7[%c0_26, %c0_27, %c0_28], %46 {strides = array<i32>} : memref<1x8x128xf32, #tpu.memory_space<vmem>>, vector<1x8x128xf32>,
    } else {
    }
    return
  }
  func.func @transform_0(%arg0: i32, %arg1: i32) -> (i32, i32, i32) {
    %c0_i32 = arith.constant 0 : i32
    %c0_i32_0 = arith.constant 0 : i32
    return %arg0, %arg1, %c0_i32 : i32, i32, i32
  }
  func.func @transform_1(%arg0: i32, %arg1: i32) -> (i32, i32) {
    %c0_i32 = arith.constant 0 : i32
    %c0_i32_0 = arith.constant 0 : i32
    %c0_i32_1 = arith.constant 0 : i32
    return %c0_i32, %c0_i32_0 : i32, i32
  }
  func.func @transform_2(%arg0: i32, %arg1: i32) -> (i32, i32) {
    %c0_i32 = arith.constant 0 : i32
    %c0_i32_0 = arith.constant 0 : i32
    %c0_i32_1 = arith.constant 0 : i32
    return %c0_i32, %c0_i32_0 : i32, i32
  }
  func.func @transform_3(%arg0: i32, %arg1: i32) -> (i32, i32) {
    %c0_i32 = arith.constant 0 : i32
    %c0_i32_0 = arith.constant 0 : i32
    %c0_i32_1 = arith.constant 0 : i32
    return %c0_i32, %c0_i32_0 : i32, i32
  }
  func.func @transform_4(%arg0: i32, %arg1: i32) -> (i32, i32) {
    %c0_i32 = arith.constant 0 : i32
    %c0_i32_0 = arith.constant 0 : i32
    %c0_i32_1 = arith.constant 0 : i32
    return %c0_i32, %c0_i32_0 : i32, i32
  }
  func.func @transform_5(%arg0: i32, %arg1: i32) -> (i32, i32, i32) {
    %c0_i32 = arith.constant 0 : i32
    %c0_i32_0 = arith.constant 0 : i32
    %c0_i32_1 = arith.constant 0 : i32
    return %arg0, %c0_i32, %c0_i32_0 : i32, i32, i32
  }
}

</mosaic_0001>

<llo_original>
// kernel: tpu_custom_call.1
$region0: #{tpu_custom_call.1}
  #allocation0 [shape = 'u32[]', space=smem, size = 0x4, offset = 0x4, fixed_abs, tag = 'smem constant byte address 0x4 - core index']
  #allocation1 [shape = 'u32[72,128]{1,0:T(1,128)}', space=vmem, size = 0x9000, scoped, tag = 'internal scratch']
  #allocation2 [shape = 'f32[8,128]{1,0:T(8,128)}', space=vmem, size = 0x1000, scoped, tag = 'scratch operand']
  %s0 = inlined_call_operand.vmem [shape: bf16[2,256,36], index: 0, kind: input, shape index: {}]
  %s1 = inlined_call_operand.vmem [shape: bf16[36,128], index: 1, kind: input, shape index: {}]
  %s2 = inlined_call_operand.vmem [shape: f32[1,128], index: 2, kind: input, shape index: {}]
  %s3 = inlined_call_operand.vmem [shape: bf16[128,128], index: 3, kind: input, shape index: {}]
  %s4 = inlined_call_operand.vmem [shape: f32[1,128], index: 4, kind: input, shape index: {}]
  %s5 = inlined_call_operand.hbm [shape: f32[2,8,128], index: 5, kind: output, shape index: {}]
  %s6 = sld [smem:[#allocation0]]
  $region61: #{tpu_custom_call.1} parent=0
    _
  %s8 = ssub.s32 1, %s6
  %s9 = scalar_select 0, %s8, %s6
  $region1: #{tpu_custom_call.1} parent=0
    #allocation3 [shape = 'u8[8192]{0}', space=vmem, size = 0x2000, scoped, tag = 'output window, operand 0']
    #allocation4 [shape = 's32[2]{0}', space=sflag, size = 0x8, scoped, tag = 'scoped memory for tpu_custom_call.1']
    %10 = vsyncpa [#allocation4], 0
    %s11 = scalar_lea.sflag [#allocation4], 1
    %12 = vsyncpa %s11, 0
    loop: start=0, step=1, limit=4
    $region2: #{tpu_custom_call.1} parent=1 // loop_pre_header
      _
    $region3: #{tpu_custom_call.1} parent=1 // loop_header
      %s14 = sphi 0, %s18
      %p15 = scmp.ge.s32.totalorder %s14, 4
      %s21 = sphi 0, %s33
      %s22 = sphi 0, %s29
      %s23 = sphi 0, %s21
      %s24 = sphi 0, %s22
      %s25 = sphi 0, %s23
      %s26 = sphi 0, %s24
      %s38 = sphi 0, %s40
      %s41 = sphi 0, %s38
      %s42 = sphi 0, %s41
      %s58 = sphi 0, %s42
      %s62 = sphi 0, %s62
      %s64 = sphi 0, %s62
      %s65 = sphi 0, %s64
      %s79 = sphi 0, %s65
      %s83 = sphi 0, %s83
      %s85 = sphi 0, %s83
      %s86 = sphi 0, %s85
      %s100 = sphi 0, %s86
      %s104 = sphi 0, %s104
      %s106 = sphi 0, %s104
      %s107 = sphi 0, %s106
      %s121 = sphi 0, %s107
      %s125 = sphi 0, %s125
      %s127 = sphi 0, %s125
      %s128 = sphi 0, %s127
      %s142 = sphi 0, %s128
      %s148 = sphi 0, %s150
      %s151 = sphi 0, %s148
      %s152 = sphi 0, %s151
      %s168 = sphi 0, %s152
    $region4: #{tpu_custom_call.1} parent=1 // loop_header_branch
      %17 = sbr.rel (%p15) target = $region8
    $region5: #{tpu_custom_call.1} parent=1 // loop_body
      %s19 = ssub.s32 %s14, 1
      %s20 = ssub.s32 %s14, 2
      %s27 = sadd.s32 1, %s22
      %p28 = scmp.ge.s32.totalorder %s27, 1
      %s29 = scalar_select %p28, 0, %s27
      %s30 = sadd.s32 1, %s21
      %s31 = scalar_select %p28, %s30, %s21
      %p32 = scmp.ge.s32.totalorder %s31, 2
      %s33 = scalar_select %p32, 0, %s31
      %s34 = ssub.s32 %s21, %s33
      %s35 = ssub.s32 %s22, %s29
      %s36 = sor.u32 %s34, %s35
      %p37 = scmp.eq.s32.totalorder %s36, 0
      %s39 = sadd.s32 %s38, 1
      %s40 = scalar_select %p37, %s38, %s39
      %p43 = pneg %p37
      %p44 = scmp.eq.s32.totalorder %s14, 1
      %p45 = por %p43, %p44
      %p46 = scmp.ne.s32.totalorder %s38, %s41
      %p47 = scmp.eq.s32.totalorder %s14, 0
      %p48 = por %p46, %p47
      %p49 = scmp.ne.s32.totalorder %s38, %s41
      %p50 = scmp.eq.s32.totalorder %s19, 1
      %p51 = por %p49, %p50
      %p52 = scmp.ne.s32.totalorder %s41, %s42
      %p53 = scmp.eq.s32.totalorder %s19, 0
      %p54 = por %p52, %p53
      %p55 = scmp.ne.s32.totalorder %s41, %s42
      %p56 = scmp.eq.s32.totalorder %s20, 1
      %p57 = por %p55, %p56
      %p59 = scmp.ne.s32.totalorder %s42, %s58
      %p60 = scmp.eq.s32.totalorder %s20, 0
      %p61 = por %p59, %p60
      %s63 = sadd.s32 %s62, 1
      %p66 = scmp.eq.s32.totalorder %s14, 1
      %p67 = scmp.ne.s32.totalorder %s62, %s64
      %p68 = scmp.eq.s32.totalorder %s14, 0
      %p69 = por %p67, %p68
      %p70 = scmp.ne.s32.totalorder %s62, %s64
      %p71 = scmp.eq.s32.totalorder %s19, 1
      %p72 = por %p70, %p71
      %p73 = scmp.ne.s32.totalorder %s64, %s65
      %p74 = scmp.eq.s32.totalorder %s19, 0
      %p75 = por %p73, %p74
      %p76 = scmp.ne.s32.totalorder %s64, %s65
      %p77 = scmp.eq.s32.totalorder %s20, 1
      %p78 = por %p76, %p77
      %p80 = scmp.ne.s32.totalorder %s65, %s79
      %p81 = scmp.eq.s32.totalorder %s20, 0
      %p82 = por %p80, %p81
      %s84 = sadd.s32 %s83, 1
      %p87 = scmp.eq.s32.totalorder %s14, 1
      %p88 = scmp.ne.s32.totalorder %s83, %s85
      %p89 = scmp.eq.s32.totalorder %s14, 0
      %p90 = por %p88, %p89
      %p91 = scmp.ne.s32.totalorder %s83, %s85
      %p92 = scmp.eq.s32.totalorder %s19, 1
      %p93 = por %p91, %p92
      %p94 = scmp.ne.s32.totalorder %s85, %s86
      %p95 = scmp.eq.s32.totalorder %s19, 0
      %p96 = por %p94, %p95
      %p97 = scmp.ne.s32.totalorder %s85, %s86
      %p98 = scmp.eq.s32.totalorder %s20, 1
      %p99 = por %p97, %p98
      %p101 = scmp.ne.s32.totalorder %s86, %s100
      %p102 = scmp.eq.s32.totalorder %s20, 0
      %p103 = por %p101, %p102
      %s105 = sadd.s32 %s104, 1
      %p108 = scmp.eq.s32.totalorder %s14, 1
      %p109 = scmp.ne.s32.totalorder %s104, %s106
      %p110 = scmp.eq.s32.totalorder %s14, 0
      %p111 = por %p109, %p110
      %p112 = scmp.ne.s32.totalorder %s104, %s106
      %p113 = scmp.eq.s32.totalorder %s19, 1
      %p114 = por %p112, %p113
      %p115 = scmp.ne.s32.totalorder %s106, %s107
      %p116 = scmp.eq.s32.totalorder %s19, 0
      %p117 = por %p115, %p116
      %p118 = scmp.ne.s32.totalorder %s106, %s107
      %p119 = scmp.eq.s32.totalorder %s20, 1
      %p120 = por %p118, %p119
      %p122 = scmp.ne.s32.totalorder %s107, %s121
      %p123 = scmp.eq.s32.totalorder %s20, 0
      %p124 = por %p122, %p123
      %s126 = sadd.s32 %s125, 1
      %p129 = scmp.eq.s32.totalorder %s14, 1
      %p130 = scmp.ne.s32.totalorder %s125, %s127
      %p131 = scmp.eq.s32.totalorder %s14, 0
      %p132 = por %p130, %p131
      %p133 = scmp.ne.s32.totalorder %s125, %s127
      %p134 = scmp.eq.s32.totalorder %s19, 1
      %p135 = por %p133, %p134
      %p136 = scmp.ne.s32.totalorder %s127, %s128
      %p137 = scmp.eq.s32.totalorder %s19, 0
      %p138 = por %p136, %p137
      %p139 = scmp.ne.s32.totalorder %s127, %s128
      %p140 = scmp.eq.s32.totalorder %s20, 1
      %p141 = por %p139, %p140
      %p143 = scmp.ne.s32.totalorder %s128, %s142
      %p144 = scmp.eq.s32.totalorder %s20, 0
      %p145 = por %p143, %p144
      %s146 = ssub.s32 %s21, %s33
      %p147 = scmp.eq.s32.totalorder %s146, 0
      %s149 = sadd.s32 %s148, 1
      %s150 = scalar_select %p147, %s148, %s149
      %p153 = pneg %p147
      %p154 = scmp.eq.s32.totalorder %s14, 1
      %p155 = por %p153, %p154
      %p156 = scmp.ne.s32.totalorder %s148, %s151
      %p157 = scmp.eq.s32.totalorder %s14, 0
      %p158 = por %p156, %p157
      %p159 = scmp.ne.s32.totalorder %s148, %s151
      %p160 = scmp.eq.s32.totalorder %s19, 1
      %p161 = por %p159, %p160
      %p162 = scmp.ne.s32.totalorder %s151, %s152
      %p163 = scmp.eq.s32.totalorder %s19, 0
      %p164 = por %p162, %p163
      %p165 = scmp.ne.s32.totalorder %s151, %s152
      %p166 = scmp.eq.s32.totalorder %s20, 1
      %p167 = por %p165, %p166
      %p169 = scmp.ne.s32.totalorder %s152, %s168
      %p170 = scmp.eq.s32.totalorder %s20, 0
      %p171 = por %p169, %p170
      %p172 = scmp.le.s32.totalorder 1, %s14
      %p173 = scmp.lt.s32.totalorder %s14, 3
      %p174 = pnand %p172, %p173
      %p175 = pneg %p174
      // Predicated region
      $region9: #{tpu_custom_call.1} parent=5 // pred_check
        _
      $region10: #{tpu_custom_call.1} parent=5 // pred_check_branch
        %177 = sbr.rel (%p174) target = $region12
      $region11: #{tpu_custom_call.1} parent=5 // pred_region
        %s178 = ssub.s32 %s14, 1
        // Predicated region
        $region13: #{tpu_custom_call.1} parent=11 // pred_check
          %p179 = pneg %p75
        $region14: #{tpu_custom_call.1} parent=11 // pred_check_branch
          %181 = sbr.rel (%p179) target = $region16
        $region15: #{tpu_custom_call.1} parent=11 // pred_region
          _
        $region16: #{tpu_custom_call.1} parent=11 // pred_fallthru
          _
        // Predicated region
        $region17: #{tpu_custom_call.1} parent=11 // pred_check
          %p182 = pneg %p96
        $region18: #{tpu_custom_call.1} parent=11 // pred_check_branch
          %184 = sbr.rel (%p182) target = $region20
        $region19: #{tpu_custom_call.1} parent=11 // pred_region
          _
        $region20: #{tpu_custom_call.1} parent=11 // pred_fallthru
          _
        // Predicated region
        $region21: #{tpu_custom_call.1} parent=11 // pred_check
          %p185 = pneg %p117
        $region22: #{tpu_custom_call.1} parent=11 // pred_check_branch
          %187 = sbr.rel (%p185) target = $region24
        $region23: #{tpu_custom_call.1} parent=11 // pred_region
          _
        $region24: #{tpu_custom_call.1} parent=11 // pred_fallthru
          _
        // Predicated region
        $region25: #{tpu_custom_call.1} parent=11 // pred_check
          %p188 = pneg %p138
        $region26: #{tpu_custom_call.1} parent=11 // pred_check_branch
          %190 = sbr.rel (%p188) target = $region28
        $region27: #{tpu_custom_call.1} parent=11 // pred_region
          _
        $region28: #{tpu_custom_call.1} parent=11 // pred_fallthru
          _
      $region12: #{tpu_custom_call.1} parent=5 // pred_fallthru
        _
      %p191 = scmp.lt.s32.totalorder %s14, 2
      // Predicated region
      $region29: #{tpu_custom_call.1} parent=5 // pred_check
        %p192 = pneg %p191
      $region30: #{tpu_custom_call.1} parent=5 // pred_check_branch
        %194 = sbr.rel (%p192) target = $region32
      $region31: #{tpu_custom_call.1} parent=5 // pred_region
        // Predicated region
        $region33: #{tpu_custom_call.1} parent=31 // pred_check
          %p195 = pneg %p48
        $region34: #{tpu_custom_call.1} parent=31 // pred_check_branch
          %197 = sbr.rel (%p195) target = $region36
        $region35: #{tpu_custom_call.1} parent=31 // pred_region
          %s198 = smul.u32 32, %s22
          %p199 = scmp.lt.s32.totalorder %s21, 1
          %s200 = scalar_select %p199, %s21, 1
          %p201 = scmp.lt.s32.totalorder %s198, 31
          %s202 = scalar_select %p201, %s198, 31
          %s203 = smul.addr %s200, 32
          %s204 = sadd.s32 %s202, %s203
          %s205 = smul.addr %s204, 4
          %s206 = scalar_lea.vmem %s0, %s205
          %s207 = smul.u32 32, %s22
        $region36: #{tpu_custom_call.1} parent=31 // pred_fallthru
          _
      $region32: #{tpu_custom_call.1} parent=5 // pred_fallthru
        _
      %p208 = scmp.le.s32.totalorder 1, %s14
      %p209 = scmp.lt.s32.totalorder %s14, 3
      %p210 = pnand %p208, %p209
      %p211 = pneg %p210
      // Predicated region
      $region37: #{tpu_custom_call.1} parent=5 // pred_check
        _
      $region38: #{tpu_custom_call.1} parent=5 // pred_check_branch
        %213 = sbr.rel (%p210) target = $region40
      $region39: #{tpu_custom_call.1} parent=5 // pred_region
        %s214 = ssub.s32 %s14, 1
        %s215 = smul.u32 32, %s24
        %p216 = scmp.lt.s32.totalorder %s23, 1
        %s217 = scalar_select %p216, %s23, 1
        %p218 = scmp.lt.s32.totalorder %s215, 31
        %s219 = scalar_select %p218, %s215, 31
        %s220 = smul.addr %s217, 32
        %s221 = sadd.s32 %s219, %s220
        %s222 = smul.addr %s221, 4
        %s223 = scalar_lea.vmem %s0, %s222
        %p224 = pneg %p54
        %p225 = pneg %p51
        %p226 = pneg %p75
        %p227 = pneg %p72
        %p228 = pneg %p96
        %p229 = pneg %p93
        %p230 = pneg %p117
        %p231 = pneg %p114
        %p232 = pneg %p138
        %p233 = pneg %p135
        %p234 = pneg %p164
        %p235 = pneg %p161
        %s236 = sand.u32 %s151, 1
        %s237 = scalar_lea.sflag [#allocation4], %s236
        %s238 = sand.u32 %s151, 1
        %s239 = smul.addr %s238, 8
        %s240 = scalar_lea.vmem [#allocation3], %s239
        %s241 = smul.u32 32, %s24
        %p242 = scmp.lt.s32.totalorder %s23, 1
        %s243 = scalar_select %p242, %s23, 1
        %p244 = scmp.lt.s32.totalorder %s241, 31
        %s245 = scalar_select %p244, %s241, 31
        %s246 = smul.addr %s243, 32
        %s247 = sadd.s32 %s245, %s246
        %s248 = smul.addr %s247, 4
        %s249 = scalar_lea.vmem %s0, %s248
        %s250 = smul.u32 32, %s24
        %p252 = scmp.eq.s32.totalorder %s24, 0
        // Predicated region
        $region41: #{tpu_custom_call.1} parent=39 // pred_check
          %p253 = pneg %p252
        $region42: #{tpu_custom_call.1} parent=39 // pred_check_branch
          %255 = sbr.rel (%p253) target = $region44
        $region43: #{tpu_custom_call.1} parent=39 // pred_region
          %256 = vst [vmem:[#allocation2] sm:$0xff] 0.0
        $region44: #{tpu_custom_call.1} parent=39 // pred_fallthru
          _
        %v257 = vld [vmem:[%s249] sm:$0xf]
        %v258 = vld [vmem:[%s249 + $0x4] sm:$0xf]
        %v259 = vld [vmem:[%s249 + $0x8] sm:$0xf]
        %v260 = vld [vmem:[%s249 + $0xc] sm:$0xf]
        %v261 = vld [vmem:[%s249 + $0x10] sm:$0xf]
        %v262 = vld [vmem:[%s249 + $0x14] sm:$0xf]
        %v263 = vld [vmem:[%s249 + $0x18] sm:$0xf]
        %v264 = vld [vmem:[%s249 + $0x1c] sm:$0xf]
        %v265 = vld [vmem:[%s249 + $0x20] sm:$0xf]
        %v266 = vld [vmem:[%s249 + $0x24] sm:$0xf]
        %v267 = vld [vmem:[%s249 + $0x28] sm:$0xf]
        %v268 = vld [vmem:[%s249 + $0x2c] sm:$0xf]
        %v269 = vld [vmem:[%s249 + $0x30] sm:$0xf]
        %v270 = vld [vmem:[%s249 + $0x34] sm:$0xf]
        %v271 = vld [vmem:[%s249 + $0x38] sm:$0xf]
        %v272 = vld [vmem:[%s249 + $0x3c] sm:$0xf]
        %v273 = vld [vmem:[%s249 + $0x40] sm:$0xf]
        %v274 = vld [vmem:[%s249 + $0x44] sm:$0xf]
        %v275 = vld [vmem:[%s249 + $0x48] sm:$0xf]
        %v276 = vld [vmem:[%s249 + $0x4c] sm:$0xf]
        %v277 = vld [vmem:[%s249 + $0x50] sm:$0xf]
        %v278 = vld [vmem:[%s249 + $0x54] sm:$0xf]
        %v279 = vld [vmem:[%s249 + $0x58] sm:$0xf]
        %v280 = vld [vmem:[%s249 + $0x5c] sm:$0xf]
        %v281 = vld [vmem:[%s249 + $0x60] sm:$0xf]
        %v282 = vld [vmem:[%s249 + $0x64] sm:$0xf]
        %v283 = vld [vmem:[%s249 + $0x68] sm:$0xf]
        %v284 = vld [vmem:[%s249 + $0x6c] sm:$0xf]
        %v285 = vld [vmem:[%s249 + $0x70] sm:$0xf]
        %v286 = vld [vmem:[%s249 + $0x74] sm:$0xf]
        %v287 = vld [vmem:[%s249 + $0x78] sm:$0xf]
        %v288 = vld [vmem:[%s249 + $0x7c] sm:$0xf]
        %v289 = vld [vmem:[%s1] sm:$0xf]
        %v290 = vld [vmem:[%s1 + $0x4] sm:$0xf]
        %v291 = vld [vmem:[%s1 + $0x8] sm:$0xf]
        %v292 = vld [vmem:[%s1 + $0xc] sm:$0xf]
        %v293 = vld [vmem:[%s1 + $0x10] sm:$0x3]
        %v294 = vld [vmem:[%s2] sm:$0x1]
        %v296 = vperm.slane %v294, 0
        %v330 = vunpack.c.l.b16 %v257
        %v331 = vunpack.c.l.b16 %v258
        %v332 = vunpack.c.l.b16 %v259
        %v333 = vunpack.c.l.b16 %v260
        %v334 = vunpack.c.l.b16 %v261
        %v335 = vunpack.c.l.b16 %v262
        %v336 = vunpack.c.l.b16 %v263
        %v337 = vunpack.c.l.b16 %v264
        %v338 = vunpack.c.l.b16 %v265
        %v339 = vunpack.c.l.b16 %v266
        %v340 = vunpack.c.l.b16 %v267
        %v341 = vunpack.c.l.b16 %v268
        %v342 = vunpack.c.l.b16 %v269
        %v343 = vunpack.c.l.b16 %v270
        %v344 = vunpack.c.l.b16 %v271
        %v345 = vunpack.c.l.b16 %v272
        %v346 = vunpack.c.l.b16 %v273
        %v347 = vunpack.c.l.b16 %v274
        %v348 = vunpack.c.l.b16 %v275
        %v349 = vunpack.c.l.b16 %v276
        %v350 = vunpack.c.l.b16 %v277
        %v351 = vunpack.c.l.b16 %v278
        %v352 = vunpack.c.l.b16 %v279
        %v353 = vunpack.c.l.b16 %v280
        %v354 = vunpack.c.l.b16 %v281
        %v355 = vunpack.c.l.b16 %v282
        %v356 = vunpack.c.l.b16 %v283
        %v357 = vunpack.c.l.b16 %v284
        %v358 = vunpack.c.l.b16 %v285
        %v359 = vunpack.c.l.b16 %v286
        %v360 = vunpack.c.l.b16 %v287
        %v361 = vunpack.c.l.b16 %v288
        %v362 = vpack.c.b16 %v331, %v330
        %v363 = vpack.c.b16 %v333, %v332
        %v364 = vpack.c.b16 %v335, %v334
        %v365 = vpack.c.b16 %v337, %v336
        %v366 = vpack.c.b16 %v339, %v338
        %v367 = vpack.c.b16 %v341, %v340
        %v368 = vpack.c.b16 %v343, %v342
        %v369 = vpack.c.b16 %v345, %v344
        %v370 = vpack.c.b16 %v347, %v346
        %v371 = vpack.c.b16 %v349, %v348
        %v372 = vpack.c.b16 %v351, %v350
        %v373 = vpack.c.b16 %v353, %v352
        %v374 = vpack.c.b16 %v355, %v354
        %v375 = vpack.c.b16 %v357, %v356
        %v376 = vpack.c.b16 %v359, %v358
        %v377 = vpack.c.b16 %v361, %v360
        %v383 = vunpack.c.l.b16 %v289
        %v384 = vunpack.c.l.b16 %v290
        %v385 = vunpack.c.l.b16 %v291
        %v386 = vunpack.c.l.b16 %v292
        %v387 = vunpack.c.l.b16 %v293
        %v388 = vpack.c.b16 %v384, %v383
        %v389 = vpack.c.b16 %v386, %v385
        %v390 = vpack.c.b16 %v387, %v387
        %vm393 = vcmask 293888
        %v395 = vsel %vm393, %v362, 0
        %v398 = vsel %vm393, %v363, 0
        %v401 = vsel %vm393, %v364, 0
        %v404 = vsel %vm393, %v365, 0
        %v407 = vsel %vm393, %v366, 0
        %v410 = vsel %vm393, %v367, 0
        %v413 = vsel %vm393, %v368, 0
        %v416 = vsel %vm393, %v369, 0
        %v419 = vsel %vm393, %v370, 0
        %v422 = vsel %vm393, %v371, 0
        %v425 = vsel %vm393, %v372, 0
        %v428 = vsel %vm393, %v373, 0
        %v431 = vsel %vm393, %v374, 0
        %v434 = vsel %vm393, %v375, 0
        %v437 = vsel %vm393, %v376, 0
        %v440 = vsel %vm393, %v377, 0
        %vm442 = vcmask 1041408
        %v444 = vsel %vm442, %v390, 0
        %446 = vmatpush.bf16.msra.mxu0 0
        %447 = vmatpush.bf16.msra.mxu0 0
        %448 = vmatpush.bf16.msra.mxu0 0
        %449 = vmatpush.bf16.msra.mxu0 0
        %450 = vmatpush.bf16.msra.mxu0 0
        %451 = vmatpush.bf16.msra.mxu0 %v444
        %452 = vmatpush.bf16.msra.mxu0 %v389
        %453 = vmatpush.bf16.msra.mxu0 %v388
        %454 = vmatmul.bf16.gmra.mxu0 %v395
        %v455 = vpop.f32.mrf.mxu0
        %v456 = vadd.f32 %v296, %v455
        %v457 = vpop.f32.mrf.mxu0
        %v458 = vadd.f32 %v296, %v457
        %459 = vmatmul.bf16.gmra.mxu0 %v398
        %v460 = vpop.f32.mrf.mxu0
        %v461 = vadd.f32 %v296, %v460
        %v462 = vpop.f32.mrf.mxu0
        %v463 = vadd.f32 %v296, %v462
        %464 = vmatmul.bf16.gmra.mxu0 %v401
        %v465 = vpop.f32.mrf.mxu0
        %v466 = vadd.f32 %v296, %v465
        %v467 = vpop.f32.mrf.mxu0
        %v468 = vadd.f32 %v296, %v467
        %469 = vmatmul.bf16.gmra.mxu0 %v404
        %v470 = vpop.f32.mrf.mxu0
        %v471 = vadd.f32 %v296, %v470
        %v472 = vpop.f32.mrf.mxu0
        %v473 = vadd.f32 %v296, %v472
        %474 = vmatmul.bf16.gmra.mxu0 %v407
        %v475 = vpop.f32.mrf.mxu0
        %v476 = vadd.f32 %v296, %v475
        %v477 = vpop.f32.mrf.mxu0
        %v478 = vadd.f32 %v296, %v477
        %479 = vmatmul.bf16.gmra.mxu0 %v410
        %v480 = vpop.f32.mrf.mxu0
        %v481 = vadd.f32 %v296, %v480
        %v482 = vpop.f32.mrf.mxu0
        %v483 = vadd.f32 %v296, %v482
        %484 = vmatmul.bf16.gmra.mxu0 %v413
        %v485 = vpop.f32.mrf.mxu0
        %v486 = vadd.f32 %v296, %v485
        %v487 = vpop.f32.mrf.mxu0
        %v488 = vadd.f32 %v296, %v487
        %489 = vmatmul.bf16.gmra.mxu0 %v416
        %v490 = vpop.f32.mrf.mxu0
        %v491 = vadd.f32 %v296, %v490
        %v492 = vpop.f32.mrf.mxu0
        %v493 = vadd.f32 %v296, %v492
        %494 = vmatmul.bf16.gmra.mxu0 %v419
        %v495 = vpop.f32.mrf.mxu0
        %v496 = vadd.f32 %v296, %v495
        %v497 = vpop.f32.mrf.mxu0
        %v498 = vadd.f32 %v296, %v497
        %499 = vmatmul.bf16.gmra.mxu0 %v422
        %v500 = vpop.f32.mrf.mxu0
        %v501 = vadd.f32 %v296, %v500
        %v502 = vpop.f32.mrf.mxu0
        %v503 = vadd.f32 %v296, %v502
        %504 = vmatmul.bf16.gmra.mxu0 %v425
        %v505 = vpop.f32.mrf.mxu0
        %v506 = vadd.f32 %v296, %v505
        %v507 = vpop.f32.mrf.mxu0
        %v508 = vadd.f32 %v296, %v507
        %509 = vmatmul.bf16.gmra.mxu0 %v428
        %v510 = vpop.f32.mrf.mxu0
        %v511 = vadd.f32 %v296, %v510
        %v512 = vpop.f32.mrf.mxu0
        %v513 = vadd.f32 %v296, %v512
        %514 = vmatmul.bf16.gmra.mxu0 %v431
        %v515 = vpop.f32.mrf.mxu0
        %v516 = vadd.f32 %v296, %v515
        %v517 = vpop.f32.mrf.mxu0
        %v518 = vadd.f32 %v296, %v517
        %519 = vmatmul.bf16.gmra.mxu0 %v434
        %v520 = vpop.f32.mrf.mxu0
        %v521 = vadd.f32 %v296, %v520
        %v522 = vpop.f32.mrf.mxu0
        %v523 = vadd.f32 %v296, %v522
        %524 = vmatmul.bf16.gmra.mxu0 %v437
        %v525 = vpop.f32.mrf.mxu0
        %v526 = vadd.f32 %v296, %v525
        %v527 = vpop.f32.mrf.mxu0
        %v528 = vadd.f32 %v296, %v527
        %529 = vmatmul.bf16.gmra.mxu0 %v440
        %v530 = vpop.f32.mrf.mxu0
        %v531 = vadd.f32 %v296, %v530
        %v532 = vpop.f32.mrf.mxu0
        %v533 = vadd.f32 %v296, %v532
        %534 = vdwg.mxu0
        %v535 = vmax.f32 %v456, 0.0
        %v536 = vmax.f32 %v458, 0.0
        %v537 = vmax.f32 %v461, 0.0
        %v538 = vmax.f32 %v463, 0.0
        %v539 = vmax.f32 %v466, 0.0
        %v540 = vmax.f32 %v468, 0.0
        %v541 = vmax.f32 %v471, 0.0
        %v542 = vmax.f32 %v473, 0.0
        %v543 = vmax.f32 %v476, 0.0
        %v544 = vmax.f32 %v478, 0.0
        %v545 = vmax.f32 %v481, 0.0
        %v546 = vmax.f32 %v483, 0.0
        %v547 = vmax.f32 %v486, 0.0
        %v548 = vmax.f32 %v488, 0.0
        %v549 = vmax.f32 %v491, 0.0
        %v550 = vmax.f32 %v493, 0.0
        %v551 = vmax.f32 %v496, 0.0
        %v552 = vmax.f32 %v498, 0.0
        %v553 = vmax.f32 %v501, 0.0
        %v554 = vmax.f32 %v503, 0.0
        %v555 = vmax.f32 %v506, 0.0
        %v556 = vmax.f32 %v508, 0.0
        %v557 = vmax.f32 %v511, 0.0
        %v558 = vmax.f32 %v513, 0.0
        %v559 = vmax.f32 %v516, 0.0
        %v560 = vmax.f32 %v518, 0.0
        %v561 = vmax.f32 %v521, 0.0
        %v562 = vmax.f32 %v523, 0.0
        %v563 = vmax.f32 %v526, 0.0
        %v564 = vmax.f32 %v528, 0.0
        %v565 = vmax.f32 %v531, 0.0
        %v566 = vmax.f32 %v533, 0.0
        %v567 = vlaneseq
        %v568 = vand.u32 %v567, 127
        %v569 = vadd.s32 %v568, 128
        %s570 = smul.u32 %s24, 256
        %v571 = vstv %s570
        %v572 = vadd.s32 %v568, %v571
        %v573 = vadd.s32 %v569, %v571
        %v574 = vlaneseq
        %v575 = vshrl.u32 %v574, 7
        %v576 = vmul.u32 %v575, 256
        %vm577 = vcmp.ge.s32.totalorder %v572, %v576
        %vm578 = vcmp.ge.s32.totalorder %v573, %v576
        %v579 = vadd.s32 %v576, 256
        %vm580 = vcmp.lt.s32.totalorder %v572, %v579
        %vm581 = vcmp.lt.s32.totalorder %v573, %v579
        %vm582 = vmand %vm577, %vm580
        %vm583 = vmand %vm578, %vm581
        %vm584 = vcmp.lt.s32.totalorder %v575, 1
        %vm585 = vmand %vm582, %vm584
        %vm586 = vmand %vm583, %vm584
        %v587 = vsel %vm585, 0.00390625, 0.0
        %v588 = vsel %vm586, 0.00390625, 0.0
        %v589 = vld [vmem:[#allocation2] sm:$0xff]
        %590 = vmatpush.msra.mxu0 %v550
        %591 = vmatpush.msra.mxu0 %v549
        %592 = vmatpush.msra.mxu0 %v548
        %593 = vmatpush.msra.mxu0 %v547
        %594 = vmatpush.msra.mxu0 %v546
        %595 = vmatpush.msra.mxu0 %v545
        %596 = vmatpush.msra.mxu0 %v544
        %597 = vmatpush.msra.mxu0 %v543
        %598 = vmatpush.msra.mxu0 %v542
        %599 = vmatpush.msra.mxu0 %v541
        %600 = vmatpush.msra.mxu0 %v540
        %601 = vmatpush.msra.mxu0 %v539
        %602 = vmatpush.msra.mxu0 %v538
        %603 = vmatpush.msra.mxu0 %v537
        %604 = vmatpush.msra.mxu0 %v536
        %605 = vmatpush.msra.mxu0 %v535
        %606 = vmatmul.f32.gmra.mxu0 %v587
        %v607 = vpop.f32.mrf.mxu0
        %v608 = vadd.f32 0.0, %v607
        %609 = vdwg.mxu0
        %610 = vmatpush.msra.mxu0 %v566
        %611 = vmatpush.msra.mxu0 %v565
        %612 = vmatpush.msra.mxu0 %v564
        %613 = vmatpush.msra.mxu0 %v563
        %614 = vmatpush.msra.mxu0 %v562
        %615 = vmatpush.msra.mxu0 %v561
        %616 = vmatpush.msra.mxu0 %v560
        %617 = vmatpush.msra.mxu0 %v559
        %618 = vmatpush.msra.mxu0 %v558
        %619 = vmatpush.msra.mxu0 %v557
        %620 = vmatpush.msra.mxu0 %v556
        %621 = vmatpush.msra.mxu0 %v555
        %622 = vmatpush.msra.mxu0 %v554
        %623 = vmatpush.msra.mxu0 %v553
        %624 = vmatpush.msra.mxu0 %v552
        %625 = vmatpush.msra.mxu0 %v551
        %626 = vmatmul.f32.gmra.mxu0 %v588
        %v627 = vpop.f32.mrf.mxu0
        %v628 = vadd.f32 %v608, %v627
        %629 = vdwg.mxu0
        %v630 = vadd.f32 %v589, %v628
        %631 = vst [vmem:[#allocation2] sm:$0xff] %v630
        // Predicated region
        $region45: #{tpu_custom_call.1} parent=39 // pred_check
          %p632 = pneg %p252
        $region46: #{tpu_custom_call.1} parent=39 // pred_check_branch
          %634 = sbr.rel (%p632) target = $region48
        $region47: #{tpu_custom_call.1} parent=39 // pred_region
          %v635 = vld [vmem:[#allocation2] sm:$0xff]
          %v636 = vpack.c.bf16 %v635, %v635
          %v637 = vld [vmem:[%s3] sm:$0xf]
          %v638 = vld [vmem:[%s3 + $0x4] sm:$0xf]
          %v639 = vld [vmem:[%s3 + $0x8] sm:$0xf]
          %v640 = vld [vmem:[%s3 + $0xc] sm:$0xf]
          %v641 = vld [vmem:[%s3 + $0x10] sm:$0xf]
          %v642 = vld [vmem:[%s3 + $0x14] sm:$0xf]
          %v643 = vld [vmem:[%s3 + $0x18] sm:$0xf]
          %v644 = vld [vmem:[%s3 + $0x1c] sm:$0xf]
          %v645 = vld [vmem:[%s3 + $0x20] sm:$0xf]
          %v646 = vld [vmem:[%s3 + $0x24] sm:$0xf]
          %v647 = vld [vmem:[%s3 + $0x28] sm:$0xf]
          %v648 = vld [vmem:[%s3 + $0x2c] sm:$0xf]
          %v649 = vld [vmem:[%s3 + $0x30] sm:$0xf]
          %v650 = vld [vmem:[%s3 + $0x34] sm:$0xf]
          %v651 = vld [vmem:[%s3 + $0x38] sm:$0xf]
          %v652 = vld [vmem:[%s3 + $0x3c] sm:$0xf]
          %v653 = vld [vmem:[%s4] sm:$0x1]
          %v655 = vperm.slane %v653, 0
          %v673 = vunpack.c.l.b16 %v637
          %v674 = vunpack.c.l.b16 %v638
          %v675 = vunpack.c.l.b16 %v639
          %v676 = vunpack.c.l.b16 %v640
          %v677 = vunpack.c.l.b16 %v641
          %v678 = vunpack.c.l.b16 %v642
          %v679 = vunpack.c.l.b16 %v643
          %v680 = vunpack.c.l.b16 %v644
          %v681 = vunpack.c.l.b16 %v645
          %v682 = vunpack.c.l.b16 %v646
          %v683 = vunpack.c.l.b16 %v647
          %v684 = vunpack.c.l.b16 %v648
          %v685 = vunpack.c.l.b16 %v649
          %v686 = vunpack.c.l.b16 %v650
          %v687 = vunpack.c.l.b16 %v651
          %v688 = vunpack.c.l.b16 %v652
          %v689 = vpack.c.b16 %v674, %v673
          %v690 = vpack.c.b16 %v676, %v675
          %v691 = vpack.c.b16 %v678, %v677
          %v692 = vpack.c.b16 %v680, %v679
          %v693 = vpack.c.b16 %v682, %v681
          %v694 = vpack.c.b16 %v684, %v683
          %v695 = vpack.c.b16 %v686, %v685
          %v696 = vpack.c.b16 %v688, %v687
          %705 = vmatpush.bf16.msra.mxu0 %v696
          %706 = vmatpush.bf16.msra.mxu0 %v695
          %707 = vmatpush.bf16.msra.mxu0 %v694
          %708 = vmatpush.bf16.msra.mxu0 %v693
          %709 = vmatpush.bf16.msra.mxu0 %v692
          %710 = vmatpush.bf16.msra.mxu0 %v691
          %711 = vmatpush.bf16.msra.mxu0 %v690
          %712 = vmatpush.bf16.msra.mxu0 %v689
          %713 = vmatmul.bf16.gmra.mxu0 %v636
          %v714 = vpop.f32.mrf.mxu0
          %v715 = vadd.f32 %v655, %v714
          %v716 = vpop.f32.mrf.mxu0
          %717 = vdwg.mxu0
          %718 = vst [vmem:[%s240] sm:$0xff] %v715
        $region48: #{tpu_custom_call.1} parent=39 // pred_fallthru
          _
        %s719 = sand.u32 %s151, 1
        %s720 = scalar_lea.sflag [#allocation4], %s719
        %s721 = sand.u32 %s151, 1
        %s722 = smul.addr %s721, 8
        %s723 = scalar_lea.vmem [#allocation3], %s722
        // Predicated region
        $region49: #{tpu_custom_call.1} parent=39 // pred_check
          %p724 = pneg %p161
        $region50: #{tpu_custom_call.1} parent=39 // pred_check_branch
          %726 = sbr.rel (%p724) target = $region52
        $region51: #{tpu_custom_call.1} parent=39 // pred_region
          %728 = vsyncadd %s720, 0
          %s729 = smul.addr %s23, 8
          %s730 = scalar_lea.hbm %s5, %s729
          %s732 = sshll.u32 %s723, 4
          %s733 = int_to_ptr.vmem [resolvable:$true] %s732
          %s734 = sshll.u32 %s730, 4
          %s735 = int_to_ptr.hbm [resolvable:$true] %s734
          %737 = dma.vmem_to_hbm [thread:$0]  %s733, 128, %s735, %s720
        $region52: #{tpu_custom_call.1} parent=39 // pred_fallthru
          _
      $region40: #{tpu_custom_call.1} parent=5 // pred_fallthru
        _
      %p738 = scmp.le.s32.totalorder 2, %s14
      // Predicated region
      $region53: #{tpu_custom_call.1} parent=5 // pred_check
        %p739 = pneg %p738
      $region54: #{tpu_custom_call.1} parent=5 // pred_check_branch
        %741 = sbr.rel (%p739) target = $region56
      $region55: #{tpu_custom_call.1} parent=5 // pred_region
        %s742 = ssub.s32 %s14, 2
        // Predicated region
        $region57: #{tpu_custom_call.1} parent=55 // pred_check
          %p743 = pneg %p167
        $region58: #{tpu_custom_call.1} parent=55 // pred_check_branch
          %745 = sbr.rel (%p743) target = $region60
        $region59: #{tpu_custom_call.1} parent=55 // pred_region
          %s746 = sand.u32 %s152, 1
          %s747 = scalar_lea.sflag [#allocation4], %s746
          %s748 = sand.u32 %s152, 1
          %s749 = smul.addr %s748, 8
          %s750 = scalar_lea.vmem [#allocation3], %s749
          %752 = dma.done %s747, 128
        $region60: #{tpu_custom_call.1} parent=55 // pred_fallthru
          _
      $region56: #{tpu_custom_call.1} parent=5 // pred_fallthru
        _
    $region6: #{tpu_custom_call.1} parent=1 // loop_footer
      %s18 = sadd.s32 1, %s14
    $region7: #{tpu_custom_call.1} parent=1 // loop_footer_branch
      %13 = sbr.rel target = $region3
    $region8: #{tpu_custom_call.1} parent=1 // loop_exit
      _
    %753 = vsyncpa [#allocation4], 1
    %s754 = scalar_lea.sflag [#allocation4], 1
    %755 = vsyncpa %s754, 1

</llo_original>
